<compile_context>
chip_gen: v6e
topology: v6e:2x2x1
jax: 0.10.0
libtpu: 0.0.40
codegen_flags: <defaults>
</compile_context>

<pallas_src>
import jax
import jax.numpy as jnp
from jax.experimental import pallas as pl
from jax.experimental.pallas import tpu as pltpu

_EPS = 1e-12  # torch.nn.functional.normalize default eps


def _channel_sim_1d_kernel(src_ref, tgt_ref, out_ref):
    # src_ref / tgt_ref: (TB, Cp) block of rows (Cp = C zero-padded to 128).
    x = src_ref[...].astype(jnp.float32)
    y = tgt_ref[...].astype(jnp.float32)

    one = jnp.float32(1.0)
    zero = jnp.float32(0.0)

    # Six lane reductions; no (TB, Cp) x_hat / y_hat temporaries.
    sumsq_x = jnp.sum(x * x, axis=-1, keepdims=True)                 # ||x||^2
    sumsq_y = jnp.sum(y * y, axis=-1, keepdims=True)                 # ||y||^2
    nnz_x = jnp.sum(jnp.where(x != zero, one, zero), axis=-1, keepdims=True)
    nnz_y = jnp.sum(jnp.where(y != zero, one, zero), axis=-1, keepdims=True)

    xy = x * y
    dot_xy = jnp.sum(xy, axis=-1, keepdims=True)                     # x . y
    # sum_i sign(x_i)*sign(y_i), via sign(x_i*y_i) on the shared product.
    cross_sign = jnp.sum(
        jnp.where(xy > zero, one, jnp.where(xy < zero, -one, zero)),
        axis=-1, keepdims=True)

    # 1 / max(||v||, eps) via EUP rsqrt (separate VLIW slot -> nearly free).
    inv_x = jax.lax.rsqrt(jnp.maximum(sumsq_x, _EPS * _EPS))
    inv_y = jax.lax.rsqrt(jnp.maximum(sumsq_y, _EPS * _EPS))

    xhat_sq = sumsq_x * (inv_x * inv_x)        # ||x_hat||^2
    yhat_sq = sumsq_y * (inv_y * inv_y)        # ||y_hat||^2
    cross_hat = dot_xy * (inv_x * inv_y)       # x_hat . y_hat

    # Per-row ||A_src_n - A_tgt_n||_F^2; zero-padded rows/cols contribute 0.
    terms = nnz_x * xhat_sq + nnz_y * yhat_sq - 2.0 * cross_sign * cross_hat

    # Raw (unscaled) partial sum for this block; /(C*B) is hoisted to JAX.
    # (1, 8, 128) block -> fully (8,128)-aligned, unmasked vst.
    out_ref[...] = jnp.full(out_ref.shape, jnp.sum(terms), out_ref.dtype)


def _round_up(n, m):
    return ((n + m - 1) // m) * m


def _choose_block_rows(batch, c_padded):
    """Rows per block: ~2 MiB of f32 per input block, a multiple of 8, and —
    when the batch allows — an even number of >= 2 grid steps so both v7x
    TensorCores get balanced work under dimension_semantics=("parallel",)."""
    padded8 = _round_up(batch, 8)
    target_rows = max(8, (((2 << 20) // 4) // max(c_padded, 1)) // 8 * 8)
    tb = min(target_rows, padded8)
    if padded8 >= 16:
        nb = -(-padded8 // tb)
        want = max(2, nb)
        if want % 2:
            want += 1
        tb = min(tb, _round_up(-(-padded8 // want), 8))
    return tb


def channel_sim_loss_1d(feat_src_T, feat_tgt_S, *, block_b=None):
    """Pallas implementation of ChannelSimLoss1D.forward. Returns a scalar."""
    assert feat_src_T.shape == feat_tgt_S.shape and feat_src_T.ndim == 2
    B, C = feat_src_T.shape

    # Lane-pad C to a multiple of 128 (zero columns contribute exactly 0 to
    # every reduction) so all loads/reductions are full unmasked vregs.
    pad_c = (-C) % 128
    Cp = C + pad_c

    if block_b is None:
        tb = _choose_block_rows(B, Cp)
    else:
        tb = _round_up(max(int(block_b), 8), 8)

    # Pad batch with zero rows (they contribute exactly 0 to the raw sums).
    pad_b = (-B) % tb
    if pad_b or pad_c:
        feat_src_T = jnp.pad(feat_src_T, ((0, pad_b), (0, pad_c)))
        feat_tgt_S = jnp.pad(feat_tgt_S, ((0, pad_b), (0, pad_c)))
    nb = (B + pad_b) // tb

    partials = pl.pallas_call(
        _channel_sim_1d_kernel,
        out_shape=jax.ShapeDtypeStruct((nb, 8, 128), jnp.float32),
        grid_spec=pltpu.PrefetchScalarGridSpec(
            num_scalar_prefetch=0,
            grid=(nb,),
            in_specs=[
                pl.BlockSpec((tb, Cp), lambda i: (i, 0)),
                pl.BlockSpec((tb, Cp), lambda i: (i, 0)),
            ],
            out_specs=pl.BlockSpec((1, 8, 128), lambda i: (i, 0, 0)),
        ),
        compiler_params=pltpu.CompilerParams(
            # Per-block partials, no carried state -> megacore-shardable.
            dimension_semantics=("parallel",),
            # 2 inputs x 2 pipeline buffers x (<= ~2 MiB) blocks plus the f32
            # casts / elementwise temporaries stays well under 32 MiB on every
            # generation (v5e scoped default is 16 MiB; v7x physical is 64 MiB).
            vmem_limit_bytes=32 * 1024 * 1024,
        ),
    )(feat_src_T, feat_tgt_S)

    # sum_b ||A_src_n - A_tgt_n||_F^2 / (C * B)   (original C and B).
    return jnp.sum(partials[:, 0, 0]) / (C * B)


def _reference_loss(feat_src_T, feat_tgt_S):
    """Pure-JAX reference mirroring the PyTorch module exactly."""
    B, C = feat_src_T.shape

    def per_batch(x, y):
        A = jnp.outer(x, x)
        Bm = jnp.outer(y, y)
        An = A / jnp.maximum(jnp.linalg.norm(A, axis=1, keepdims=True), _EPS)
        Bn = Bm / jnp.maximum(jnp.linalg.norm(Bm, axis=1, keepdims=True), _EPS)
        return jnp.sum((An - Bn) ** 2) / C

    return jnp.mean(jax.vmap(per_batch)(feat_src_T, feat_tgt_S))


if __name__ == "__main__":
    key = jax.random.PRNGKey(0)
    k1, k2 = jax.random.split(key)

    # Primary small config (lane-aligned C).
    B, C = 4, 128
    feat_src = jax.random.normal(k1, (B, C), dtype=jnp.float32)
    feat_tgt = jax.random.normal(k2, (B, C), dtype=jnp.float32)
    # Exercise exact-zero handling (post-ReLU-like features).
    feat_src = feat_src.at[0, :3].set(0.0)
    feat_tgt = feat_tgt.at[1, 5:9].set(0.0)

    loss = jax.block_until_ready(channel_sim_loss_1d(feat_src, feat_tgt))
    ref = jax.block_until_ready(_reference_loss(feat_src, feat_tgt))
    assert jnp.allclose(loss, ref, rtol=1e-4, atol=1e-6), (loss, ref)

    # Secondary config: non-128-multiple C and multi-block batch (exercises
    # the lane/batch zero-padding and the >=2 "parallel" grid steps).
    k3, k4 = jax.random.split(k2)
    B2, C2 = 20, 96
    src2 = jax.random.normal(k3, (B2, C2), dtype=jnp.float32)
    tgt2 = jax.random.normal(k4, (B2, C2), dtype=jnp.float32)
    loss2 = jax.block_until_ready(channel_sim_loss_1d(src2, tgt2))
    ref2 = jax.block_until_ready(_reference_loss(src2, tgt2))
    assert jnp.allclose(loss2, ref2, rtol=1e-4, atol=1e-6), (loss2, ref2)

    print("KERNEL_OK")
</pallas_src>

<mosaic_0001>
module attributes {stable_mosaic.version = 11 : i64} {
  func.func @_channel_sim_1d_kernel(%arg0: i32, %arg1: memref<8x128xf32, #tpu.memory_space<vmem>>, %arg2: memref<8x128xf32, #tpu.memory_space<vmem>>, %arg3: memref<1x8x128xf32, #tpu.memory_space<vmem>>) attributes {dimension_semantics = [#tpu.dimension_semantics<parallel>], iteration_bounds = array<i64: 1>, scalar_prefetch = 0 : i64, scratch_operands = 0 : i64, tpu.core_type = #tpu.core_type<tc>, window_params = [{transform_indices = @transform_0, window_bounds = array<i64: 8, 128>}, {transform_indices = @transform_1, window_bounds = array<i64: 8, 128>}, {transform_indices = @transform_2, window_bounds = array<i64: 1, 8, 128>}]} {
    %c0 = arith.constant 0 : index
    %c0_0 = arith.constant 0 : index
    %0 = vector.load %arg1[%c0, %c0_0] : memref<8x128xf32, #tpu.memory_space<vmem>>, vector<8x128xf32>
    %c0_1 = arith.constant 0 : index
    %c0_2 = arith.constant 0 : index
    %1 = vector.load %arg2[%c0_1, %c0_2] : memref<8x128xf32, #tpu.memory_space<vmem>>, vector<8x128xf32>
    %2 = arith.mulf %0, %0 : vector<8x128xf32>
    %cst = arith.constant dense<0.000000e+00> : vector<8xf32>
    %3 = vector.multi_reduction <add>, %2, %cst [1] : vector<8x128xf32> to vector<8xf32>
    %4 = vector.shape_cast %3 : vector<8xf32> to vector<8x1xf32>
    %5 = arith.mulf %1, %1 : vector<8x128xf32>
    %cst_3 = arith.constant dense<0.000000e+00> : vector<8xf32>
    %6 = vector.multi_reduction <add>, %5, %cst_3 [1] : vector<8x128xf32> to vector<8xf32>
    %7 = vector.shape_cast %6 : vector<8xf32> to vector<8x1xf32>
    %cst_4 = arith.constant 0.000000e+00 : f32
    %8 = vector.broadcast %cst_4 : f32 to vector<8x128xf32>
    %9 = arith.cmpf one, %0, %8 : vector<8x128xf32>
    %cst_5 = arith.constant 1.000000e+00 : f32
    %cst_6 = arith.constant 0.000000e+00 : f32
    %10 = vector.broadcast %cst_5 : f32 to vector<8x128xf32>
    %11 = vector.broadcast %cst_6 : f32 to vector<8x128xf32>
    %12 = arith.select %9, %10, %11 : vector<8x128xi1>, vector<8x128xf32>
    %cst_7 = arith.constant dense<0.000000e+00> : vector<8xf32>
    %13 = vector.multi_reduction <add>, %12, %cst_7 [1] : vector<8x128xf32> to vector<8xf32>
    %14 = vector.shape_cast %13 : vector<8xf32> to vector<8x1xf32>
    %cst_8 = arith.constant 0.000000e+00 : f32
    %15 = vector.broadcast %cst_8 : f32 to vector<8x128xf32>
    %16 = arith.cmpf one, %1, %15 : vector<8x128xf32>
    %cst_9 = arith.constant 1.000000e+00 : f32
    %cst_10 = arith.constant 0.000000e+00 : f32
    %17 = vector.broadcast %cst_9 : f32 to vector<8x128xf32>
    %18 = vector.broadcast %cst_10 : f32 to vector<8x128xf32>
    %19 = arith.select %16, %17, %18 : vector<8x128xi1>, vector<8x128xf32>
    %cst_11 = arith.constant dense<0.000000e+00> : vector<8xf32>
    %20 = vector.multi_reduction <add>, %19, %cst_11 [1] : vector<8x128xf32> to vector<8xf32>
    %21 = vector.shape_cast %20 : vector<8xf32> to vector<8x1xf32>
    %22 = arith.mulf %0, %1 : vector<8x128xf32>
    %cst_12 = arith.constant dense<0.000000e+00> : vector<8xf32>
    %23 = vector.multi_reduction <add>, %22, %cst_12 [1] : vector<8x128xf32> to vector<8xf32>
    %24 = vector.shape_cast %23 : vector<8xf32> to vector<8x1xf32>
    %cst_13 = arith.constant 0.000000e+00 : f32
    %25 = vector.broadcast %cst_13 : f32 to vector<8x128xf32>
    %26 = arith.cmpf ogt, %22, %25 : vector<8x128xf32>
    %cst_14 = arith.constant 0.000000e+00 : f32
    %27 = vector.broadcast %cst_14 : f32 to vector<8x128xf32>
    %28 = arith.cmpf olt, %22, %27 : vector<8x128xf32>
    %cst_15 = arith.constant 0.000000e+00 : f32
    %cst_16 = arith.constant 1.000000e+00 : f32
    %29 = arith.subf %cst_15, %cst_16 : f32
    %cst_17 = arith.constant 0.000000e+00 : f32
    %30 = vector.broadcast %29 : f32 to vector<8x128xf32>
    %31 = vector.broadcast %cst_17 : f32 to vector<8x128xf32>
    %32 = arith.select %28, %30, %31 : vector<8x128xi1>, vector<8x128xf32>
    %cst_18 = arith.constant 1.000000e+00 : f32
    %33 = vector.broadcast %cst_18 : f32 to vector<8x128xf32>
    %34 = arith.select %26, %33, %32 : vector<8x128xi1>, vector<8x128xf32>
    %cst_19 = arith.constant dense<0.000000e+00> : vector<8xf32>
    %35 = vector.multi_reduction <add>, %34, %cst_19 [1] : vector<8x128xf32> to vector<8xf32>
    %36 = vector.shape_cast %35 : vector<8xf32> to vector<8x1xf32>
    %cst_20 = arith.constant 1.000000e-24 : f32
    %37 = vector.broadcast %cst_20 : f32 to vector<8x1xf32>
    %38 = arith.maximumf %4, %37 : vector<8x1xf32>
    %39 = math.rsqrt %38 : vector<8x1xf32>
    %cst_21 = arith.constant 1.000000e-24 : f32
    %40 = vector.broadcast %cst_21 : f32 to vector<8x1xf32>
    %41 = arith.maximumf %7, %40 : vector<8x1xf32>
    %42 = math.rsqrt %41 : vector<8x1xf32>
    %43 = arith.mulf %39, %39 : vector<8x1xf32>
    %44 = arith.mulf %4, %43 : vector<8x1xf32>
    %45 = arith.mulf %42, %42 : vector<8x1xf32>
    %46 = arith.mulf %7, %45 : vector<8x1xf32>
    %47 = arith.mulf %39, %42 : vector<8x1xf32>
    %48 = arith.mulf %24, %47 : vector<8x1xf32>
    %49 = arith.mulf %14, %44 : vector<8x1xf32>
    %50 = arith.mulf %21, %46 : vector<8x1xf32>
    %51 = arith.addf %49, %50 : vector<8x1xf32>
    %cst_22 = arith.constant 2.000000e+00 : f32
    %52 = vector.broadcast %cst_22 : f32 to vector<8x1xf32>
    %53 = arith.mulf %52, %36 : vector<8x1xf32>
    %54 = arith.mulf %53, %48 : vector<8x1xf32>
    %55 = arith.subf %51, %54 : vector<8x1xf32>
    %56 = vector.shape_cast %55 : vector<8x1xf32> to vector<1x8x1xf32>
    %cst_23 = arith.constant dense<0.000000e+00> : vector<1xf32>
    %57 = vector.multi_reduction <add>, %56, %cst_23 [1, 2] : vector<1x8x1xf32> to vector<1xf32>
    %58 = vector.shape_cast %57 : vector<1xf32> to vector<1x1x1xf32>
    %59 = vector.extract %58[0, 0, 0] : f32 from vector<1x1x1xf32>
    %60 = vector.broadcast %59 : f32 to vector<1x8x128xf32>
    %c0_24 = arith.constant 0 : index
    %c0_25 = arith.constant 0 : index
    %c0_26 = arith.constant 0 : index
    %61 = vector.load %arg3[%c0_24, %c0_25, %c0_26] : memref<1x8x128xf32, #tpu.memory_space<vmem>>, vector<1x8x128xf32>
    tpu.vector_store %arg3[%c0_24, %c0_25, %c0_26], %60 {strides = array<i32>} : memref<1x8x128xf32, #tpu.memory_space<vmem>>, vector<1x8x128xf32>,
    return
  }
  func.func @transform_0(%arg0: i32) -> (i32, i32) {
    %c0_i32 = arith.constant 0 : i32
    %c0_i32_0 = arith.constant 0 : i32
    return %arg0, %c0_i32 : i32, i32
  }
  func.func @transform_1(%arg0: i32) -> (i32, i32) {
    %c0_i32 = arith.constant 0 : i32
    %c0_i32_0 = arith.constant 0 : i32
    return %arg0, %c0_i32 : i32, i32
  }
  func.func @transform_2(%arg0: i32) -> (i32, i32, i32) {
    %c0_i32 = arith.constant 0 : i32
    %c0_i32_0 = arith.constant 0 : i32
    %c0_i32_1 = arith.constant 0 : i32
    return %arg0, %c0_i32, %c0_i32_0 : i32, i32, i32
  }
}

</mosaic_0001>

<llo_original>
// kernel: tpu_custom_call.1
$region0: #{tpu_custom_call.1}
  #allocation0 [shape = 'u32[]', space=smem, size = 0x4, offset = 0x4, fixed_abs, tag = 'smem constant byte address 0x4 - core index']
  #allocation1 [shape = 'u32[144,128]{1,0:T(1,128)}', space=vmem, size = 0x12000, scoped, tag = 'internal scratch']
  %s0 = inlined_call_operand.hbm [shape: f32[8,128], index: 0, kind: input, shape index: {}]
  %s1 = inlined_call_operand.hbm [shape: f32[8,128], index: 1, kind: input, shape index: {}]
  %s2 = inlined_call_operand.hbm [shape: f32[1,8,128], index: 2, kind: output, shape index: {}]
  %s3 = sld [smem:[#allocation0]]
  $region26: #{tpu_custom_call.1} parent=0
    _
  %s5 = ssub.s32 1, %s3
  %s6 = scalar_select 0, %s5, %s3
  $region1: #{tpu_custom_call.1} parent=0
    #allocation2 [shape = 'u8[4096]{0}', space=vmem, size = 0x1000, scoped, tag = 'input window, operand 0, single buffered']
    #allocation3 [shape = 's32[1]{0}', space=sflag, size = 0x4, scoped, tag = 'scoped memory for tpu_custom_call.1']
    #allocation4 [shape = 's32[1]{0}', space=sflag, size = 0x4, scoped, tag = 'scoped memory for tpu_custom_call.1']
    #allocation5 [shape = 'u8[4096]{0}', space=vmem, size = 0x1000, scoped, tag = 'input window, operand 1, single buffered']
    #allocation6 [shape = 's32[1]{0}', space=sflag, size = 0x4, scoped, tag = 'scoped memory for tpu_custom_call.1']
    #allocation7 [shape = 'u8[4096]{0}', space=vmem, size = 0x1000, scoped, tag = 'output window, operand 0, single buffered']
    %7 = vsyncpa [#allocation3], 0
    %8 = vsyncpa [#allocation6], 0
    %9 = vsyncpa [#allocation4], 0
    // Predicated region
    $region2: #{tpu_custom_call.1} parent=1 // pred_check
      _
    $region3: #{tpu_custom_call.1} parent=1 // pred_check_branch
      %11 = sbr.rel (0) target = $region5
    $region4: #{tpu_custom_call.1} parent=1 // pred_region
      %s13 = ssub.s32 128, 128
      %14 = vsyncadd [#allocation3], %s13
      %s16 = sshll.u32 [#allocation2], 4
      %s17 = int_to_ptr.vmem [resolvable:$true] %s16
      %19 = dma.hbm_to_vmem [thread:$0]  %s0, 128, %s17, [#allocation3]
    $region5: #{tpu_custom_call.1} parent=1 // pred_fallthru
      _
    // Predicated region
    $region6: #{tpu_custom_call.1} parent=1 // pred_check
      _
    $region7: #{tpu_custom_call.1} parent=1 // pred_check_branch
      %21 = sbr.rel (0) target = $region9
    $region8: #{tpu_custom_call.1} parent=1 // pred_region
      %s23 = ssub.s32 128, 128
      %24 = vsyncadd [#allocation6], %s23
      %s26 = sshll.u32 [#allocation5], 4
      %s27 = int_to_ptr.vmem [resolvable:$true] %s26
      %29 = dma.hbm_to_vmem [thread:$0]  %s1, 128, %s27, [#allocation6]
    $region9: #{tpu_custom_call.1} parent=1 // pred_fallthru
      _
    // Predicated region
    $region10: #{tpu_custom_call.1} parent=1 // pred_check
      _
    $region11: #{tpu_custom_call.1} parent=1 // pred_check_branch
      %31 = sbr.rel (0) target = $region13
    $region12: #{tpu_custom_call.1} parent=1 // pred_region
      %32 = dma.done [#allocation3], 128
    $region13: #{tpu_custom_call.1} parent=1 // pred_fallthru
      _
    // Predicated region
    $region14: #{tpu_custom_call.1} parent=1 // pred_check
      _
    $region15: #{tpu_custom_call.1} parent=1 // pred_check_branch
      %34 = sbr.rel (0) target = $region17
    $region16: #{tpu_custom_call.1} parent=1 // pred_region
      %35 = dma.done [#allocation6], 128
    $region17: #{tpu_custom_call.1} parent=1 // pred_fallthru
      _
    %v36 = vld [vmem:[#allocation2] sm:$0xff]
    %v37 = vld [vmem:[#allocation5] sm:$0xff]
    %v38 = vmul.f32 %v36, %v36
    %39 = vadd.xlane.f32.xlu0 %v38
    %v40 = vpop.xlane.xlu0 %39
    %v41 = vmul.f32 %v37, %v37
    %42 = vadd.xlane.f32.xlu0 %v41
    %v43 = vpop.xlane.xlu0 %42
    %vm44 = vcmp.ne.f32.partialorder %v36, 0.0
    %v45 = vsel %vm44, 1.0, 0.0
    %46 = vadd.xlane.f32.xlu0 %v45
    %v47 = vpop.xlane.xlu0 %46
    %vm48 = vcmp.ne.f32.partialorder %v37, 0.0
    %v49 = vsel %vm48, 1.0, 0.0
    %50 = vadd.xlane.f32.xlu0 %v49
    %v51 = vpop.xlane.xlu0 %50
    %v52 = vmul.f32 %v36, %v37
    %53 = vadd.xlane.f32.xlu0 %v52
    %v54 = vpop.xlane.xlu0 %53
    %vm55 = vcmp.gt.f32.partialorder %v52, 0.0
    %vm56 = vcmp.lt.f32.partialorder %v52, 0.0
    %v57 = vsel %vm56, -1.0, 0.0
    %v58 = vsel %vm55, 1.0, %v57
    %59 = vadd.xlane.f32.xlu0 %v58
    %v60 = vpop.xlane.xlu0 %59
    %v61 = vmax.f32 %v40, 1e-24
    %v62 = vrsqrt.pop %v61
    %v63 = vmax.f32 %v43, 1e-24
    %v64 = vrsqrt.pop %v63
    %v65 = vmul.f32 %v62, %v62
    %v66 = vmul.f32 %v40, %v65
    %v67 = vmul.f32 %v64, %v64
    %v68 = vmul.f32 %v43, %v67
    %v69 = vmul.f32 %v62, %v64
    %v70 = vmul.f32 %v54, %v69
    %v71 = vmul.f32 %v47, %v66
    %v72 = vmul.f32 %v51, %v68
    %v73 = vadd.f32 %v71, %v72
    %v74 = vmul.f32 %v60, 2.0
    %v75 = vmul.f32 %v74, %v70
    %v76 = vsub.f32 %v73, %v75
    %vm77 = vcmask 7168
    %v78 = vsel %vm77, %v76, 0.0
    %79 = vadd.xlane.f32.xlu0 %v78
    %v80 = vpop.xlane.xlu0 %79
    %v81 = vrot.slane %v80, 4
    %v82 = vadd.f32 %v80, %v81
    %v83 = vrot.slane %v82, 2
    %v84 = vadd.f32 %v82, %v83
    %v85 = vrot.slane %v84, 1
    %v86 = vadd.f32 %v84, %v85
    %s87 = vtos %v86
    %v88 = vstv %s87
    %89 = vst [vmem:[#allocation7] sm:$0xff] %v88
    // Predicated region
    $region18: #{tpu_custom_call.1} parent=1 // pred_check
      _
    $region19: #{tpu_custom_call.1} parent=1 // pred_check_branch
      %91 = sbr.rel (0) target = $region21
    $region20: #{tpu_custom_call.1} parent=1 // pred_region
      %s93 = ssub.s32 128, 128
      %94 = vsyncadd [#allocation4], %s93
      %s96 = sshll.u32 [#allocation7], 4
      %s97 = int_to_ptr.vmem [resolvable:$true] %s96
      %99 = dma.vmem_to_hbm [thread:$0]  %s97, 128, %s2, [#allocation4]
    $region21: #{tpu_custom_call.1} parent=1 // pred_fallthru
      _
    // Predicated region
    $region22: #{tpu_custom_call.1} parent=1 // pred_check
      _
    $region23: #{tpu_custom_call.1} parent=1 // pred_check_branch
      %101 = sbr.rel (0) target = $region25
    $region24: #{tpu_custom_call.1} parent=1 // pred_region
      %102 = dma.done [#allocation4], 128
    $region25: #{tpu_custom_call.1} parent=1 // pred_fallthru
      _
    %103 = vsyncpa [#allocation3], 1
    %104 = vsyncpa [#allocation6], 1
    %105 = vsyncpa [#allocation4], 1

</llo_original>
